<compile_context>
chip_gen: v7x
topology: tpu7x:2x2x1
jax: 0.10.0
libtpu: 0.0.40
codegen_flags: <defaults>
</compile_context>

<pallas_src>
import functools
import math

import jax
import jax.numpy as jnp
from jax import lax
from jax.experimental import pallas as pl
from jax.experimental.pallas import tpu as pltpu


LANE = 128
# ~4 MiB blocks: past the measured HBM-roofline plateau, fewer per-step
# pipeline overheads; with in+out double-buffered (= 4 buffers) this is 16 MiB,
# well inside the 32 MiB scoped VMEM we request explicitly below.
_TARGET_BLOCK_BYTES = 4 * 1024 * 1024
# Safe on every generation: v5e/v6e have 128 MiB physical VMEM, v7x has 64 MiB.
_SCOPED_VMEM_BYTES = 32 * 1024 * 1024


def _sublane_multiple(itemsize):
    # f32 -> 8, bf16/f16 -> 16, int8/fp8 -> 32 (packed-sublane alignment).
    return 8 * max(1, 4 // itemsize)


def _round_up(x, m):
    return (x + m - 1) // m * m


def _pick_row_tile(rows, width, itemsize):
    """Row tile ~_TARGET_BLOCK_BYTES, sublane aligned, >=2 blocks when possible."""
    sub = _sublane_multiple(itemsize)
    tr = max(sub, (_TARGET_BLOCK_BYTES // max(1, width * itemsize)) // sub * sub)
    if rows >= 2 * sub:
        # Guarantee at least two grid blocks so both v7x TensorCores stream the
        # "parallel" axis (no-op on single-TC v5e/v6e).
        tr = min(tr, _round_up(pl.cdiv(rows, 2), sub))
    if tr >= rows:
        tr = rows  # full-dim block: valid for any row count
    return tr


# ---------------------------------------------------------------------------
# EucLinear: y = (x @ W^T) * scale   (bias param unused in the torch forward;
# dropout is identity at inference).
# ---------------------------------------------------------------------------
def _euc_linear_kernel(x_ref, w_ref, o_ref, *, scale):
    acc = jnp.dot(x_ref[...], w_ref[...], preferred_element_type=jnp.float32)
    o_ref[...] = (acc * scale).astype(o_ref.dtype)


def euc_linear(x, weight, *, scale=1.0):
    """EucLinear forward. x: (M, in_dim), weight: (out_dim, in_dim) torch layout."""
    M, K = x.shape
    N = weight.shape[0]
    w_t = weight.T  # (K, N)
    itemsize = jnp.dtype(x.dtype).itemsize

    # Full-K blocks (graph feature dims are small); tile M and N.
    # TODO(synk): add a K grid axis + f32 accumulator scratch if in_dim ever
    # grows large enough that (tm, K) + (K, tn) blocks pressure VMEM.
    tm = M if M <= 128 else 128
    tn = N if N <= 128 else 128

    cost = pl.CostEstimate(
        flops=2 * M * N * K,
        transcendentals=0,
        bytes_accessed=(M * K + K * N + M * N) * itemsize,
    )
    return pl.pallas_call(
        functools.partial(_euc_linear_kernel, scale=scale),
        out_shape=jax.ShapeDtypeStruct((M, N), x.dtype),
        grid=(pl.cdiv(M, tm), pl.cdiv(N, tn)),
        in_specs=[
            pl.BlockSpec((tm, K), lambda i, j: (i, 0)),
            pl.BlockSpec((K, tn), lambda i, j: (0, j)),
        ],
        out_specs=pl.BlockSpec((tm, tn), lambda i, j: (i, j)),
        compiler_params=pltpu.CompilerParams(
            dimension_semantics=("parallel", "parallel"),
            vmem_limit_bytes=_SCOPED_VMEM_BYTES,
        ),
        cost_estimate=cost,
    )(x, w_t)


# ---------------------------------------------------------------------------
# Fused EucNorm (LayerNorm over last dim) + EucAct (ReLU) -- the activation is
# an epilogue on the normalized tile, so it adds zero HBM traffic.
# ---------------------------------------------------------------------------
def _norm_relu_kernel(x_ref, g_ref, b_ref, o_ref, *, eps):
    x = x_ref[...].astype(jnp.float32)
    mean = jnp.mean(x, axis=-1, keepdims=True)
    xc = x - mean
    var = jnp.mean(xc * xc, axis=-1, keepdims=True)
    inv = lax.rsqrt(var + eps)
    y = xc * inv * g_ref[...].astype(jnp.float32) + b_ref[...].astype(jnp.float32)
    o_ref[...] = jnp.maximum(y, 0.0).astype(o_ref.dtype)


def euc_norm_act(x, gamma, beta, *, eps=1e-5):
    """Fused LayerNorm(last dim) + ReLU. x: (..., D), gamma/beta: (D,)."""
    orig_shape = x.shape
    D = orig_shape[-1]
    x2 = x.reshape(-1, D)
    M = x2.shape[0]
    itemsize = jnp.dtype(x.dtype).itemsize
    tr = _pick_row_tile(M, D, itemsize)

    g2 = gamma.reshape(1, D)
    b2 = beta.reshape(1, D)

    cost = pl.CostEstimate(
        flops=8 * M * D,
        transcendentals=M,
        bytes_accessed=(2 * M * D + 2 * D) * itemsize,
    )
    out = pl.pallas_call(
        functools.partial(_norm_relu_kernel, eps=eps),
        out_shape=jax.ShapeDtypeStruct((M, D), x.dtype),
        grid=(pl.cdiv(M, tr),),
        in_specs=[
            pl.BlockSpec((tr, D), lambda i: (i, 0)),
            pl.BlockSpec((1, D), lambda i: (0, 0)),
            pl.BlockSpec((1, D), lambda i: (0, 0)),
        ],
        out_specs=pl.BlockSpec((tr, D), lambda i: (i, 0)),
        compiler_params=pltpu.CompilerParams(
            dimension_semantics=("parallel",),
            vmem_limit_bytes=_SCOPED_VMEM_BYTES,
        ),
        cost_estimate=cost,
    )(x2, g2, b2)
    return out.reshape(orig_shape)


# ---------------------------------------------------------------------------
# Standalone EucAct (for the use_norm='none' configuration).
# ---------------------------------------------------------------------------
def _relu_kernel(x_ref, o_ref):
    o_ref[...] = jnp.maximum(x_ref[...], jnp.zeros((), x_ref.dtype))


def _relu_2d(x2d):
    M, D = x2d.shape
    itemsize = jnp.dtype(x2d.dtype).itemsize
    tr = _pick_row_tile(M, D, itemsize)
    cost = pl.CostEstimate(
        flops=M * D, transcendentals=0, bytes_accessed=2 * M * D * itemsize
    )
    return pl.pallas_call(
        _relu_kernel,
        out_shape=jax.ShapeDtypeStruct((M, D), x2d.dtype),
        grid=(pl.cdiv(M, tr),),
        in_specs=[pl.BlockSpec((tr, D), lambda i: (i, 0))],
        out_specs=pl.BlockSpec((tr, D), lambda i: (i, 0)),
        compiler_params=pltpu.CompilerParams(
            dimension_semantics=("parallel",),
            vmem_limit_bytes=_SCOPED_VMEM_BYTES,
        ),
        cost_estimate=cost,
    )(x2d)


def euc_act(x):
    """EucAct forward (elementwise ReLU) -- standalone Pallas kernel."""
    orig_shape = x.shape
    total = x.size
    if total % LANE == 0:
        # Common case: free, lane-dense (rows, 128) view.
        x2 = x.reshape(total // LANE, LANE)
    else:
        # Ragged case: operate on the (rows, last_dim) view directly -- no
        # pad/ravel/slice HBM passes; last-dim-full block is always legal.
        d = orig_shape[-1] if x.ndim > 1 else total
        x2 = x.reshape(-1, d)
    return _relu_2d(x2).reshape(orig_shape)


# ---------------------------------------------------------------------------
# EucATLayer forward (inference).
# ---------------------------------------------------------------------------
def euc_at_layer_forward(x, lin_weight, ln_gamma, ln_beta, *, scale=1.0, eps=1e-5):
    h = euc_linear(x, lin_weight, scale=scale)
    # TODO(synk): GATConv(out_dim, out_dim, heads=4) over `adj` goes here; not
    # provided in the spec, so `h` feeds the fused norm+act directly.
    return euc_norm_act(h, ln_gamma, ln_beta, eps=eps)


if __name__ == "__main__":
    key = jax.random.PRNGKey(0)
    kx, kw = jax.random.split(key)

    num_nodes, in_dim, out_dim = 8, 32, 32
    x = jax.random.normal(kx, (num_nodes, in_dim), dtype=jnp.float32)
    w = jax.random.normal(kw, (out_dim, in_dim), dtype=jnp.float32) / math.sqrt(in_dim)
    gamma = jnp.ones((out_dim,), jnp.float32)
    beta = jnp.zeros((out_dim,), jnp.float32)

    y = jax.block_until_ready(euc_at_layer_forward(x, w, gamma, beta))

    # Pure-jnp reference: linear -> layernorm -> relu.
    h_ref = x @ w.T
    mu = h_ref.mean(-1, keepdims=True)
    var = ((h_ref - mu) ** 2).mean(-1, keepdims=True)
    ref = jnp.maximum((h_ref - mu) / jnp.sqrt(var + 1e-5) * gamma + beta, 0.0)
    assert y.shape == (num_nodes, out_dim) and y.dtype == x.dtype
    assert jnp.allclose(y, ref, atol=1e-2, rtol=1e-2)

    # Standalone activation path (use_norm='none'): f32, bf16, ragged shapes.
    xa = jax.random.normal(jax.random.PRNGKey(1), (2, 4, 16, 16), dtype=jnp.float32)
    ya = jax.block_until_ready(euc_act(xa))
    assert ya.shape == xa.shape and jnp.array_equal(ya, jnp.maximum(xa, 0.0))

    xb = xa.astype(jnp.bfloat16)
    yb = jax.block_until_ready(euc_act(xb))
    assert yb.dtype == jnp.bfloat16 and jnp.array_equal(yb, jnp.maximum(xb, 0))

    xr = jax.random.normal(jax.random.PRNGKey(2), (2, 7, 13, 5), dtype=jnp.float32)
    yr = jax.block_until_ready(euc_act(xr))
    assert yr.shape == xr.shape and jnp.array_equal(yr, jnp.maximum(xr, 0.0))

    print("KERNEL_OK")
</pallas_src>

<mosaic_0001>
module attributes {stable_mosaic.version = 11 : i64} {
  func.func @_euc_linear_kernel(%arg0: i32, %arg1: i32, %arg2: memref<8x32xf32, #tpu.memory_space<vmem>>, %arg3: memref<32x32xf32, #tpu.memory_space<vmem>>, %arg4: memref<8x32xf32, #tpu.memory_space<vmem>>) attributes {dimension_semantics = [#tpu.dimension_semantics<parallel>, #tpu.dimension_semantics<parallel>], iteration_bounds = array<i64: 1, 1>, scalar_prefetch = 0 : i64, scratch_operands = 0 : i64, tpu.core_type = #tpu.core_type<tc>, window_params = [{transform_indices = @transform_0, window_bounds = array<i64: 8, 32>}, {transform_indices = @transform_1, window_bounds = array<i64: 32, 32>}, {transform_indices = @transform_2, window_bounds = array<i64: 8, 32>}]} {
    %c0 = arith.constant 0 : index
    %c0_0 = arith.constant 0 : index
    %0 = vector.load %arg2[%c0, %c0_0] : memref<8x32xf32, #tpu.memory_space<vmem>>, vector<8x32xf32>
    %c0_1 = arith.constant 0 : index
    %c0_2 = arith.constant 0 : index
    %1 = vector.load %arg3[%c0_1, %c0_2] : memref<32x32xf32, #tpu.memory_space<vmem>>, vector<32x32xf32>
    %cst = arith.constant dense<0.000000e+00> : vector<8x32xf32>
    %2 = tpu.matmul %0, %1, %cst {dimension_numbers = #tpu.dot_dimension_numbers<[1], [0], [0], [1], [0, 0, 1, 1], [], []>} : vector<8x32xf32>, vector<32x32xf32>, vector<8x32xf32> -> vector<8x32xf32>
    %cst_3 = arith.constant 1.000000e+00 : f32
    %3 = vector.broadcast %cst_3 : f32 to vector<8x32xf32>
    %4 = arith.mulf %2, %3 : vector<8x32xf32>
    %c0_4 = arith.constant 0 : index
    %c0_5 = arith.constant 0 : index
    %5 = vector.load %arg4[%c0_4, %c0_5] : memref<8x32xf32, #tpu.memory_space<vmem>>, vector<8x32xf32>
    tpu.vector_store %arg4[%c0_4, %c0_5], %4 {strides = array<i32>} : memref<8x32xf32, #tpu.memory_space<vmem>>, vector<8x32xf32>,
    return
  }
  func.func @transform_0(%arg0: i32, %arg1: i32) -> (i32, i32) {
    %c0_i32 = arith.constant 0 : i32
    %c0_i32_0 = arith.constant 0 : i32
    return %arg0, %c0_i32 : i32, i32
  }
  func.func @transform_1(%arg0: i32, %arg1: i32) -> (i32, i32) {
    %c0_i32 = arith.constant 0 : i32
    %c0_i32_0 = arith.constant 0 : i32
    return %c0_i32, %arg1 : i32, i32
  }
  func.func @transform_2(%arg0: i32, %arg1: i32) -> (i32, i32) {
    %c0_i32 = arith.constant 0 : i32
    return %arg0, %arg1 : i32, i32
  }
}

</mosaic_0001>

<llo_original>
// kernel: tpu_custom_call.1
$region0: #{tpu_custom_call.1}
  #allocation0 [shape = 'u32[]', space=smem, size = 0x4, offset = 0x4, fixed_abs, tag = 'smem constant byte address 0x4 - core index']
  #allocation1 [shape = 'u32[144,128]{1,0:T(1,128)}', space=vmem, size = 0x12000, scoped, tag = 'internal scratch']
  %s0 = inlined_call_operand.hbm [shape: f32[8,32], index: 0, kind: input, shape index: {}]
  %s1 = inlined_call_operand.hbm [shape: f32[32,32], index: 1, kind: input, shape index: {}]
  %s2 = inlined_call_operand.hbm [shape: f32[8,32], index: 2, kind: output, shape index: {}]
  %s3 = sld [smem:[#allocation0]]
  $region26: #{tpu_custom_call.1} parent=0
    _
  %s5 = ssub.s32 1, %s3
  %s6 = scalar_select 0, %s5, %s3
  $region1: #{tpu_custom_call.1} parent=0
    #allocation2 [shape = 'u8[4096]{0}', space=vmem, size = 0x1000, scoped, tag = 'input window, operand 0, single buffered']
    #allocation3 [shape = 's32[1]{0}', space=sflag, size = 0x4, scoped, tag = 'scoped memory for tpu_custom_call.1']
    #allocation4 [shape = 's32[1]{0}', space=sflag, size = 0x4, scoped, tag = 'scoped memory for tpu_custom_call.1']
    #allocation5 [shape = 'u8[16384]{0}', space=vmem, size = 0x4000, scoped, tag = 'input window, operand 1, single buffered']
    #allocation6 [shape = 's32[1]{0}', space=sflag, size = 0x4, scoped, tag = 'scoped memory for tpu_custom_call.1']
    #allocation7 [shape = 'u8[4096]{0}', space=vmem, size = 0x1000, scoped, tag = 'output window, operand 0, single buffered']
    %7 = vsyncpa [#allocation3], 0
    %8 = vsyncpa [#allocation6], 0
    %9 = vsyncpa [#allocation4], 0
    // Predicated region
    $region2: #{tpu_custom_call.1} parent=1 // pred_check
      _
    $region3: #{tpu_custom_call.1} parent=1 // pred_check_branch
      %11 = sbr.rel (0) target = $region5
    $region4: #{tpu_custom_call.1} parent=1 // pred_region
      %s13 = ssub.s32 128, 128
      %14 = vsyncadd [#allocation3], %s13
      %s16 = sshll.u32 [#allocation2], 4
      %s17 = int_to_ptr.vmem [resolvable:$true] %s16
      %19 = dma.hbm_to_vmem [thread:$0]  %s0, 128, %s17, [#allocation3]
    $region5: #{tpu_custom_call.1} parent=1 // pred_fallthru
      _
    // Predicated region
    $region6: #{tpu_custom_call.1} parent=1 // pred_check
      _
    $region7: #{tpu_custom_call.1} parent=1 // pred_check_branch
      %21 = sbr.rel (0) target = $region9
    $region8: #{tpu_custom_call.1} parent=1 // pred_region
      %s23 = ssub.s32 512, 512
      %24 = vsyncadd [#allocation6], %s23
      %s25 = sshll.u32 [#allocation5], 4
      %s26 = int_to_ptr.vmem [resolvable:$true] %s25
      %31 = dma.hbm_to_vmem [thread:$0]  %s1, 512, %s26, [#allocation6], 128, 128, 8
    $region9: #{tpu_custom_call.1} parent=1 // pred_fallthru
      _
    // Predicated region
    $region10: #{tpu_custom_call.1} parent=1 // pred_check
      _
    $region11: #{tpu_custom_call.1} parent=1 // pred_check_branch
      %33 = sbr.rel (0) target = $region13
    $region12: #{tpu_custom_call.1} parent=1 // pred_region
      %34 = dma.done [#allocation3], 128
    $region13: #{tpu_custom_call.1} parent=1 // pred_fallthru
      _
    // Predicated region
    $region14: #{tpu_custom_call.1} parent=1 // pred_check
      _
    $region15: #{tpu_custom_call.1} parent=1 // pred_check_branch
      %36 = sbr.rel (0) target = $region17
    $region16: #{tpu_custom_call.1} parent=1 // pred_region
      %37 = dma.done [#allocation6], 512
    $region17: #{tpu_custom_call.1} parent=1 // pred_fallthru
      _
    %v38 = vld [vmem:[#allocation2] sm:$0xff]
    %v39 = vld [vmem:[#allocation5] sm:$0xff]
    %v40 = vld [vmem:[#allocation5 + $0x8] sm:$0xff]
    %v41 = vld [vmem:[#allocation5 + $0x10] sm:$0xff]
    %v42 = vld [vmem:[#allocation5 + $0x18] sm:$0xff]
    %vm43 = vcmask 261120
    %v45 = vsel %vm43, %v38, 0
    %47 = vmatprep.subr.mxu0 0.0
    %48 = vmatpush1.msra.mxu0 %v39
    %49 = vmatprep.subr.mxu0 0.0
    %50 = vmatpush1.msra.mxu0 %v40
    %51 = vmatprep.subr.mxu0 0.0
    %52 = vmatpush1.msra.mxu0 %v41
    %53 = vmatprep.subr.mxu0 0.0
    %54 = vmatpush1.msra.mxu0 %v42
    %55 = vmatprep.subr.mxu0 0.0
    %56 = vmatpush1.msra.mxu0 0.0
    %57 = vmatprep.subr.mxu0 0.0
    %58 = vmatpush1.msra.mxu0 0.0
    %59 = vmatprep.subr.mxu0 0.0
    %60 = vmatpush1.msra.mxu0 0.0
    %61 = vmatprep.subr.mxu0 0.0
    %62 = vmatpush1.msra.mxu0 0.0
    %63 = vmatprep.subr.mxu0 0.0
    %64 = vmatpush1.msra.mxu0 0.0
    %65 = vmatprep.subr.mxu0 0.0
    %66 = vmatpush1.msra.mxu0 0.0
    %67 = vmatprep.subr.mxu0 0.0
    %68 = vmatpush1.msra.mxu0 0.0
    %69 = vmatprep.subr.mxu0 0.0
    %70 = vmatpush1.msra.mxu0 0.0
    %71 = vmatprep.subr.mxu0 0.0
    %72 = vmatpush1.msra.mxu0 0.0
    %73 = vmatprep.subr.mxu0 0.0
    %74 = vmatpush1.msra.mxu0 0.0
    %75 = vmatprep.subr.mxu0 0.0
    %76 = vmatpush1.msra.mxu0 0.0
    %77 = vmatprep.subr.mxu0 0.0
    %78 = vmatpush1.msra.mxu0 0.0
    %79 = vmatprep.subr.mxu0 0.0
    %80 = vmatpush1.msra.mxu0 0.0
    %81 = vmatprep.subr.mxu0 0.0
    %82 = vmatpush1.msra.mxu0 0.0
    %83 = vmatprep.subr.mxu0 0.0
    %84 = vmatpush1.msra.mxu0 0.0
    %85 = vmatprep.subr.mxu0 0.0
    %86 = vmatpush1.msra.mxu0 0.0
    %87 = vmatprep.subr.mxu0 0.0
    %88 = vmatpush1.msra.mxu0 0.0
    %89 = vmatprep.subr.mxu0 0.0
    %90 = vmatpush1.msra.mxu0 0.0
    %91 = vmatprep.subr.mxu0 0.0
    %92 = vmatpush1.msra.mxu0 0.0
    %93 = vmatprep.subr.mxu0 0.0
    %94 = vmatpush1.msra.mxu0 0.0
    %95 = vmatprep.subr.mxu0 0.0
    %96 = vmatpush1.msra.mxu0 0.0
    %97 = vmatprep.subr.mxu0 0.0
    %98 = vmatpush1.msra.mxu0 0.0
    %99 = vmatprep.subr.mxu0 0.0
    %100 = vmatpush1.msra.mxu0 0.0
    %101 = vmatprep.subr.mxu0 0.0
    %102 = vmatpush1.msra.mxu0 0.0
    %103 = vmatprep.subr.mxu0 0.0
    %104 = vmatpush1.msra.mxu0 0.0
    %105 = vmatprep.subr.mxu0 0.0
    %106 = vmatpush1.msra.mxu0 0.0
    %107 = vmatprep.subr.mxu0 0.0
    %108 = vmatpush1.msra.mxu0 0.0
    %109 = vmatprep.subr.mxu0 0.0
    %110 = vmatpush1.msra.mxu0 0.0
    %111 = vmatprep.mubr.f32.mxu0 0.0
    %112 = vmatmul.mubr.f32.gmra.mrb[0].mxu0 %v45
    %v113 = vpop.f32.mrb[0].mxu0
    %v114 = vadd.f32 0.0, %v113
    %v115 = vpop.f32.mrb[0].mxu0
    %116 = vdwg.mxu0
    %117 = vst.msk [vmem:[#allocation7] sm:$0xff] %vm43, %v114
    // Predicated region
    $region18: #{tpu_custom_call.1} parent=1 // pred_check
      _
    $region19: #{tpu_custom_call.1} parent=1 // pred_check_branch
      %119 = sbr.rel (0) target = $region21
    $region20: #{tpu_custom_call.1} parent=1 // pred_region
      %s121 = ssub.s32 128, 128
      %122 = vsyncadd [#allocation4], %s121
      %s124 = sshll.u32 [#allocation7], 4
      %s125 = int_to_ptr.vmem [resolvable:$true] %s124
      %127 = dma.vmem_to_hbm [thread:$0]  %s125, 128, %s2, [#allocation4]
    $region21: #{tpu_custom_call.1} parent=1 // pred_fallthru
      _
    // Predicated region
    $region22: #{tpu_custom_call.1} parent=1 // pred_check
      _
    $region23: #{tpu_custom_call.1} parent=1 // pred_check_branch
      %129 = sbr.rel (0) target = $region25
    $region24: #{tpu_custom_call.1} parent=1 // pred_region
      %130 = dma.done [#allocation4], 128
    $region25: #{tpu_custom_call.1} parent=1 // pred_fallthru
      _
    %131 = vsyncpa [#allocation3], 1
    %132 = vsyncpa [#allocation6], 1
    %133 = vsyncpa [#allocation4], 1

</llo_original>
